<compile_context>
chip_gen: v6e
topology: v6e:2x2x1
jax: 0.10.0
libtpu: 0.0.40
codegen_flags: <defaults>
</compile_context>

<pallas_src>
import jax
import jax.numpy as jnp
from jax import lax
from jax.experimental import pallas as pl
from jax.experimental.pallas import tpu as pltpu

HIDDEN_SIZE = 64
INPUT_SIZE = 1
OUTPUT_SIZE = 1


def rnn_kernel(x_ref, wih_t_ref, whh_t_ref, bias_ref, wl_t_ref, bl_ref,
               out_ref, xw_scratch, hs_scratch):
    S, B, I = x_ref.shape
    H = whh_t_ref.shape[0]
    O = out_ref.shape[-1]

    # ---- Hoisted (fully parallel) input projection: x @ Wih^T + (b_ih + b_hh). ----
    bias_b = bias_ref[...].reshape(1, 1, H)                         # (1, 1, H)
    if I == 1:
        # K == 1 contraction -> VPU broadcast multiply; keep it off the MXU.
        xw = x_ref[...] * wih_t_ref[...].reshape(1, 1, H)           # (S, B, H)
    else:
        xw = jnp.einsum("sbi,ih->sbh", x_ref[...], wih_t_ref[...],
                        preferred_element_type=jnp.float32)
    xw_scratch[...] = xw + bias_b

    # ---- Serial recurrence: only h @ Whh^T + add + tanh on the critical path. ----
    whh_t = whh_t_ref[...]                                          # (H, H), hoisted load

    def step(t, h):
        h_new = jnp.tanh(
            xw_scratch[t]
            + jnp.dot(h, whh_t, preferred_element_type=jnp.float32))
        hs_scratch[t] = h_new
        return h_new

    lax.fori_loop(0, S, step, jnp.zeros((B, H), jnp.float32), unroll=True)

    # ---- Hoisted output head, written once. ----
    hs = hs_scratch[...]                                            # (S, B, H)
    if O == 1:
        wl_vec = wl_t_ref[...].reshape(1, 1, H)                     # (1, 1, H)
        out = jnp.sum(hs * wl_vec, axis=-1, keepdims=True)          # (S, B, 1)
    else:
        out = jnp.einsum("sbh,ho->sbo", hs, wl_t_ref[...],
                         preferred_element_type=jnp.float32)
    out_ref[...] = out + bl_ref[...].reshape(1, 1, O)


def rnn_forward(x, w_ih, w_hh, b_ih, b_hh, w_lin, b_lin):
    """x: (S, B, I) f32; weights in PyTorch layout:
       w_ih (H, I), w_hh (H, H), b_ih (H,), b_hh (H,), w_lin (O, H), b_lin (O,)."""
    S, B, I = x.shape
    H = w_ih.shape[0]
    O = w_lin.shape[0]

    # Pre-transpose weights so the kernel does plain (M, K) @ (K, N) contractions,
    # and fold the two RNN biases into one.
    wih_t = jnp.asarray(w_ih.T, jnp.float32)                        # (I, H)
    whh_t = jnp.asarray(w_hh.T, jnp.float32)                        # (H, H)
    wl_t = jnp.asarray(w_lin.T, jnp.float32)                        # (H, O)
    bias = (jnp.asarray(b_ih, jnp.float32)
            + jnp.asarray(b_hh, jnp.float32)).reshape(1, H)         # (1, H)
    bl = jnp.asarray(b_lin, jnp.float32).reshape(1, O)              # (1, O)

    vmem_spec = pl.BlockSpec(memory_space=pltpu.MemorySpace.VMEM)

    return pl.pallas_call(
        rnn_kernel,
        out_shape=jax.ShapeDtypeStruct((S, B, O), jnp.float32),
        in_specs=[vmem_spec] * 6,
        out_specs=vmem_spec,
        scratch_shapes=[
            pltpu.VMEM((S, B, H), jnp.float32),   # hoisted input projection + bias
            pltpu.VMEM((S, B, H), jnp.float32),   # hidden states for the hoisted head
        ],
    )(jnp.asarray(x, jnp.float32), wih_t, whh_t, bias, wl_t, bl)


def rnn_reference(x, w_ih, w_hh, b_ih, b_hh, w_lin, b_lin):
    """Pure-JAX reference matching torch nn.RNN(tanh) + Linear."""
    def step(h, x_t):
        h_new = jnp.tanh(x_t @ w_ih.T + b_ih + h @ w_hh.T + b_hh)
        return h_new, h_new

    B = x.shape[1]
    H = w_ih.shape[0]
    h0 = jnp.zeros((B, H), jnp.float32)
    _, hs = jax.lax.scan(step, h0, x)            # (S, B, H)
    return hs @ w_lin.T + b_lin                  # (S, B, O)


if __name__ == "__main__":
    key = jax.random.PRNGKey(0)
    S, B = 8, 2
    keys = jax.random.split(key, 7)

    # Deterministic parameter init, uniform(-1/sqrt(H), 1/sqrt(H)) like PyTorch.
    bound = 1.0 / jnp.sqrt(jnp.float32(HIDDEN_SIZE))
    w_ih = jax.random.uniform(keys[0], (HIDDEN_SIZE, INPUT_SIZE), jnp.float32, -bound, bound)
    w_hh = jax.random.uniform(keys[1], (HIDDEN_SIZE, HIDDEN_SIZE), jnp.float32, -bound, bound)
    b_ih = jax.random.uniform(keys[2], (HIDDEN_SIZE,), jnp.float32, -bound, bound)
    b_hh = jax.random.uniform(keys[3], (HIDDEN_SIZE,), jnp.float32, -bound, bound)
    w_lin = jax.random.uniform(keys[4], (OUTPUT_SIZE, HIDDEN_SIZE), jnp.float32, -bound, bound)
    b_lin = jax.random.uniform(keys[5], (OUTPUT_SIZE,), jnp.float32, -bound, bound)

    x = jax.random.normal(keys[6], (S, B, INPUT_SIZE), jnp.float32)

    out = rnn_forward(x, w_ih, w_hh, b_ih, b_hh, w_lin, b_lin)
    out = jax.block_until_ready(out)

    ref = rnn_reference(x, w_ih, w_hh, b_ih, b_hh, w_lin, b_lin)
    assert out.shape == (S, B, OUTPUT_SIZE), out.shape
    err = float(jnp.max(jnp.abs(out - ref)))
    assert jnp.allclose(out, ref, atol=1e-4, rtol=1e-5), err

    print("KERNEL_OK")
</pallas_src>

<mosaic_0001>
module attributes {stable_mosaic.version = 11 : i64} {
  func.func @rnn_kernel(%arg0: memref<8x2x1xf32, #tpu.memory_space<vmem>>, %arg1: memref<1x64xf32, #tpu.memory_space<vmem>>, %arg2: memref<64x64xf32, #tpu.memory_space<vmem>>, %arg3: memref<1x64xf32, #tpu.memory_space<vmem>>, %arg4: memref<64x1xf32, #tpu.memory_space<vmem>>, %arg5: memref<1x1xf32, #tpu.memory_space<vmem>>, %arg6: memref<8x2x1xf32, #tpu.memory_space<vmem>>, %arg7: memref<8x2x64xf32, #tpu.memory_space<vmem>>, %arg8: memref<8x2x64xf32, #tpu.memory_space<vmem>>) attributes {dimension_semantics = [], scalar_prefetch = 0 : i64, scratch_operands = 2 : i64, tpu.core_type = #tpu.core_type<tc>} {
    %c0 = arith.constant 0 : index
    %c0_0 = arith.constant 0 : index
    %0 = vector.load %arg3[%c0, %c0_0] : memref<1x64xf32, #tpu.memory_space<vmem>>, vector<1x64xf32>
    %1 = vector.shape_cast %0 : vector<1x64xf32> to vector<1x1x64xf32>
    %c0_1 = arith.constant 0 : index
    %c0_2 = arith.constant 0 : index
    %c0_3 = arith.constant 0 : index
    %2 = vector.load %arg0[%c0_1, %c0_2, %c0_3] : memref<8x2x1xf32, #tpu.memory_space<vmem>>, vector<8x2x1xf32>
    %c0_4 = arith.constant 0 : index
    %c0_5 = arith.constant 0 : index
    %3 = vector.load %arg1[%c0_4, %c0_5] : memref<1x64xf32, #tpu.memory_space<vmem>>, vector<1x64xf32>
    %4 = vector.shape_cast %3 : vector<1x64xf32> to vector<1x1x64xf32>
    %5 = vector.broadcast %2 : vector<8x2x1xf32> to vector<8x2x64xf32>
    %6 = vector.broadcast %4 : vector<1x1x64xf32> to vector<8x2x64xf32>
    %7 = arith.mulf %5, %6 : vector<8x2x64xf32>
    %8 = vector.broadcast %1 : vector<1x1x64xf32> to vector<8x2x64xf32>
    %9 = arith.addf %7, %8 : vector<8x2x64xf32>
    %c0_6 = arith.constant 0 : index
    %c0_7 = arith.constant 0 : index
    %c0_8 = arith.constant 0 : index
    %10 = vector.load %arg7[%c0_6, %c0_7, %c0_8] : memref<8x2x64xf32, #tpu.memory_space<vmem>>, vector<8x2x64xf32>
    tpu.vector_store %arg7[%c0_6, %c0_7, %c0_8], %9 {strides = array<i32>} : memref<8x2x64xf32, #tpu.memory_space<vmem>>, vector<8x2x64xf32>,
    %c0_9 = arith.constant 0 : index
    %c0_10 = arith.constant 0 : index
    %11 = vector.load %arg2[%c0_9, %c0_10] : memref<64x64xf32, #tpu.memory_space<vmem>>, vector<64x64xf32>
    %cst = arith.constant 0.000000e+00 : f32
    %12 = vector.broadcast %cst : f32 to vector<2x64xf32>
    %c0_i32 = arith.constant 0 : i32
    %13 = arith.index_cast %c0_i32 : i32 to index
    %c0_11 = arith.constant 0 : index
    %c0_12 = arith.constant 0 : index
    %14 = vector.load %arg7[%13, %c0_11, %c0_12] : memref<8x2x64xf32, #tpu.memory_space<vmem>>, vector<1x2x64xf32>
    %15 = vector.shape_cast %14 : vector<1x2x64xf32> to vector<2x64xf32>
    %cst_13 = arith.constant dense<0.000000e+00> : vector<2x64xf32>
    %16 = tpu.matmul %12, %11, %cst_13 {dimension_numbers = #tpu.dot_dimension_numbers<[1], [0], [0], [1], [0, 0, 1, 1], [], []>} : vector<2x64xf32>, vector<64x64xf32>, vector<2x64xf32> -> vector<2x64xf32>
    %17 = arith.addf %15, %16 : vector<2x64xf32>
    %18 = math.tanh %17 : vector<2x64xf32>
    %19 = arith.index_cast %c0_i32 : i32 to index
    %c0_14 = arith.constant 0 : index
    %c0_15 = arith.constant 0 : index
    %20 = vector.load %arg8[%19, %c0_14, %c0_15] : memref<8x2x64xf32, #tpu.memory_space<vmem>>, vector<1x2x64xf32>
    %21 = vector.shape_cast %20 : vector<1x2x64xf32> to vector<2x64xf32>
    %22 = vector.shape_cast %18 : vector<2x64xf32> to vector<1x2x64xf32>
    tpu.vector_store %arg8[%19, %c0_14, %c0_15], %22 {strides = array<i32>} : memref<8x2x64xf32, #tpu.memory_space<vmem>>, vector<1x2x64xf32>,
    %c1_i32 = arith.constant 1 : i32
    %23 = arith.index_cast %c1_i32 : i32 to index
    %c0_16 = arith.constant 0 : index
    %c0_17 = arith.constant 0 : index
    %24 = vector.load %arg7[%23, %c0_16, %c0_17] : memref<8x2x64xf32, #tpu.memory_space<vmem>>, vector<1x2x64xf32>
    %25 = vector.shape_cast %24 : vector<1x2x64xf32> to vector<2x64xf32>
    %cst_18 = arith.constant dense<0.000000e+00> : vector<2x64xf32>
    %26 = tpu.matmul %18, %11, %cst_18 {dimension_numbers = #tpu.dot_dimension_numbers<[1], [0], [0], [1], [0, 0, 1, 1], [], []>} : vector<2x64xf32>, vector<64x64xf32>, vector<2x64xf32> -> vector<2x64xf32>
    %27 = arith.addf %25, %26 : vector<2x64xf32>
    %28 = math.tanh %27 : vector<2x64xf32>
    %29 = arith.index_cast %c1_i32 : i32 to index
    %c0_19 = arith.constant 0 : index
    %c0_20 = arith.constant 0 : index
    %30 = vector.load %arg8[%29, %c0_19, %c0_20] : memref<8x2x64xf32, #tpu.memory_space<vmem>>, vector<1x2x64xf32>
    %31 = vector.shape_cast %30 : vector<1x2x64xf32> to vector<2x64xf32>
    %32 = vector.shape_cast %28 : vector<2x64xf32> to vector<1x2x64xf32>
    tpu.vector_store %arg8[%29, %c0_19, %c0_20], %32 {strides = array<i32>} : memref<8x2x64xf32, #tpu.memory_space<vmem>>, vector<1x2x64xf32>,
    %c2_i32 = arith.constant 2 : i32
    %33 = arith.index_cast %c2_i32 : i32 to index
    %c0_21 = arith.constant 0 : index
    %c0_22 = arith.constant 0 : index
    %34 = vector.load %arg7[%33, %c0_21, %c0_22] : memref<8x2x64xf32, #tpu.memory_space<vmem>>, vector<1x2x64xf32>
    %35 = vector.shape_cast %34 : vector<1x2x64xf32> to vector<2x64xf32>
    %cst_23 = arith.constant dense<0.000000e+00> : vector<2x64xf32>
    %36 = tpu.matmul %28, %11, %cst_23 {dimension_numbers = #tpu.dot_dimension_numbers<[1], [0], [0], [1], [0, 0, 1, 1], [], []>} : vector<2x64xf32>, vector<64x64xf32>, vector<2x64xf32> -> vector<2x64xf32>
    %37 = arith.addf %35, %36 : vector<2x64xf32>
    %38 = math.tanh %37 : vector<2x64xf32>
    %39 = arith.index_cast %c2_i32 : i32 to index
    %c0_24 = arith.constant 0 : index
    %c0_25 = arith.constant 0 : index
    %40 = vector.load %arg8[%39, %c0_24, %c0_25] : memref<8x2x64xf32, #tpu.memory_space<vmem>>, vector<1x2x64xf32>
    %41 = vector.shape_cast %40 : vector<1x2x64xf32> to vector<2x64xf32>
    %42 = vector.shape_cast %38 : vector<2x64xf32> to vector<1x2x64xf32>
    tpu.vector_store %arg8[%39, %c0_24, %c0_25], %42 {strides = array<i32>} : memref<8x2x64xf32, #tpu.memory_space<vmem>>, vector<1x2x64xf32>,
    %c3_i32 = arith.constant 3 : i32
    %43 = arith.index_cast %c3_i32 : i32 to index
    %c0_26 = arith.constant 0 : index
    %c0_27 = arith.constant 0 : index
    %44 = vector.load %arg7[%43, %c0_26, %c0_27] : memref<8x2x64xf32, #tpu.memory_space<vmem>>, vector<1x2x64xf32>
    %45 = vector.shape_cast %44 : vector<1x2x64xf32> to vector<2x64xf32>
    %cst_28 = arith.constant dense<0.000000e+00> : vector<2x64xf32>
    %46 = tpu.matmul %38, %11, %cst_28 {dimension_numbers = #tpu.dot_dimension_numbers<[1], [0], [0], [1], [0, 0, 1, 1], [], []>} : vector<2x64xf32>, vector<64x64xf32>, vector<2x64xf32> -> vector<2x64xf32>
    %47 = arith.addf %45, %46 : vector<2x64xf32>
    %48 = math.tanh %47 : vector<2x64xf32>
    %49 = arith.index_cast %c3_i32 : i32 to index
    %c0_29 = arith.constant 0 : index
    %c0_30 = arith.constant 0 : index
    %50 = vector.load %arg8[%49, %c0_29, %c0_30] : memref<8x2x64xf32, #tpu.memory_space<vmem>>, vector<1x2x64xf32>
    %51 = vector.shape_cast %50 : vector<1x2x64xf32> to vector<2x64xf32>
    %52 = vector.shape_cast %48 : vector<2x64xf32> to vector<1x2x64xf32>
    tpu.vector_store %arg8[%49, %c0_29, %c0_30], %52 {strides = array<i32>} : memref<8x2x64xf32, #tpu.memory_space<vmem>>, vector<1x2x64xf32>,
    %c4_i32 = arith.constant 4 : i32
    %53 = arith.index_cast %c4_i32 : i32 to index
    %c0_31 = arith.constant 0 : index
    %c0_32 = arith.constant 0 : index
    %54 = vector.load %arg7[%53, %c0_31, %c0_32] : memref<8x2x64xf32, #tpu.memory_space<vmem>>, vector<1x2x64xf32>
    %55 = vector.shape_cast %54 : vector<1x2x64xf32> to vector<2x64xf32>
    %cst_33 = arith.constant dense<0.000000e+00> : vector<2x64xf32>
    %56 = tpu.matmul %48, %11, %cst_33 {dimension_numbers = #tpu.dot_dimension_numbers<[1], [0], [0], [1], [0, 0, 1, 1], [], []>} : vector<2x64xf32>, vector<64x64xf32>, vector<2x64xf32> -> vector<2x64xf32>
    %57 = arith.addf %55, %56 : vector<2x64xf32>
    %58 = math.tanh %57 : vector<2x64xf32>
    %59 = arith.index_cast %c4_i32 : i32 to index
    %c0_34 = arith.constant 0 : index
    %c0_35 = arith.constant 0 : index
    %60 = vector.load %arg8[%59, %c0_34, %c0_35] : memref<8x2x64xf32, #tpu.memory_space<vmem>>, vector<1x2x64xf32>
    %61 = vector.shape_cast %60 : vector<1x2x64xf32> to vector<2x64xf32>
    %62 = vector.shape_cast %58 : vector<2x64xf32> to vector<1x2x64xf32>
    tpu.vector_store %arg8[%59, %c0_34, %c0_35], %62 {strides = array<i32>} : memref<8x2x64xf32, #tpu.memory_space<vmem>>, vector<1x2x64xf32>,
    %c5_i32 = arith.constant 5 : i32
    %63 = arith.index_cast %c5_i32 : i32 to index
    %c0_36 = arith.constant 0 : index
    %c0_37 = arith.constant 0 : index
    %64 = vector.load %arg7[%63, %c0_36, %c0_37] : memref<8x2x64xf32, #tpu.memory_space<vmem>>, vector<1x2x64xf32>
    %65 = vector.shape_cast %64 : vector<1x2x64xf32> to vector<2x64xf32>
    %cst_38 = arith.constant dense<0.000000e+00> : vector<2x64xf32>
    %66 = tpu.matmul %58, %11, %cst_38 {dimension_numbers = #tpu.dot_dimension_numbers<[1], [0], [0], [1], [0, 0, 1, 1], [], []>} : vector<2x64xf32>, vector<64x64xf32>, vector<2x64xf32> -> vector<2x64xf32>
    %67 = arith.addf %65, %66 : vector<2x64xf32>
    %68 = math.tanh %67 : vector<2x64xf32>
    %69 = arith.index_cast %c5_i32 : i32 to index
    %c0_39 = arith.constant 0 : index
    %c0_40 = arith.constant 0 : index
    %70 = vector.load %arg8[%69, %c0_39, %c0_40] : memref<8x2x64xf32, #tpu.memory_space<vmem>>, vector<1x2x64xf32>
    %71 = vector.shape_cast %70 : vector<1x2x64xf32> to vector<2x64xf32>
    %72 = vector.shape_cast %68 : vector<2x64xf32> to vector<1x2x64xf32>
    tpu.vector_store %arg8[%69, %c0_39, %c0_40], %72 {strides = array<i32>} : memref<8x2x64xf32, #tpu.memory_space<vmem>>, vector<1x2x64xf32>,
    %c6_i32 = arith.constant 6 : i32
    %73 = arith.index_cast %c6_i32 : i32 to index
    %c0_41 = arith.constant 0 : index
    %c0_42 = arith.constant 0 : index
    %74 = vector.load %arg7[%73, %c0_41, %c0_42] : memref<8x2x64xf32, #tpu.memory_space<vmem>>, vector<1x2x64xf32>
    %75 = vector.shape_cast %74 : vector<1x2x64xf32> to vector<2x64xf32>
    %cst_43 = arith.constant dense<0.000000e+00> : vector<2x64xf32>
    %76 = tpu.matmul %68, %11, %cst_43 {dimension_numbers = #tpu.dot_dimension_numbers<[1], [0], [0], [1], [0, 0, 1, 1], [], []>} : vector<2x64xf32>, vector<64x64xf32>, vector<2x64xf32> -> vector<2x64xf32>
    %77 = arith.addf %75, %76 : vector<2x64xf32>
    %78 = math.tanh %77 : vector<2x64xf32>
    %79 = arith.index_cast %c6_i32 : i32 to index
    %c0_44 = arith.constant 0 : index
    %c0_45 = arith.constant 0 : index
    %80 = vector.load %arg8[%79, %c0_44, %c0_45] : memref<8x2x64xf32, #tpu.memory_space<vmem>>, vector<1x2x64xf32>
    %81 = vector.shape_cast %80 : vector<1x2x64xf32> to vector<2x64xf32>
    %82 = vector.shape_cast %78 : vector<2x64xf32> to vector<1x2x64xf32>
    tpu.vector_store %arg8[%79, %c0_44, %c0_45], %82 {strides = array<i32>} : memref<8x2x64xf32, #tpu.memory_space<vmem>>, vector<1x2x64xf32>,
    %c7_i32 = arith.constant 7 : i32
    %83 = arith.index_cast %c7_i32 : i32 to index
    %c0_46 = arith.constant 0 : index
    %c0_47 = arith.constant 0 : index
    %84 = vector.load %arg7[%83, %c0_46, %c0_47] : memref<8x2x64xf32, #tpu.memory_space<vmem>>, vector<1x2x64xf32>
    %85 = vector.shape_cast %84 : vector<1x2x64xf32> to vector<2x64xf32>
    %cst_48 = arith.constant dense<0.000000e+00> : vector<2x64xf32>
    %86 = tpu.matmul %78, %11, %cst_48 {dimension_numbers = #tpu.dot_dimension_numbers<[1], [0], [0], [1], [0, 0, 1, 1], [], []>} : vector<2x64xf32>, vector<64x64xf32>, vector<2x64xf32> -> vector<2x64xf32>
    %87 = arith.addf %85, %86 : vector<2x64xf32>
    %88 = math.tanh %87 : vector<2x64xf32>
    %89 = arith.index_cast %c7_i32 : i32 to index
    %c0_49 = arith.constant 0 : index
    %c0_50 = arith.constant 0 : index
    %90 = vector.load %arg8[%89, %c0_49, %c0_50] : memref<8x2x64xf32, #tpu.memory_space<vmem>>, vector<1x2x64xf32>
    %91 = vector.shape_cast %90 : vector<1x2x64xf32> to vector<2x64xf32>
    %92 = vector.shape_cast %88 : vector<2x64xf32> to vector<1x2x64xf32>
    tpu.vector_store %arg8[%89, %c0_49, %c0_50], %92 {strides = array<i32>} : memref<8x2x64xf32, #tpu.memory_space<vmem>>, vector<1x2x64xf32>,
    %c8_i32 = arith.constant 8 : i32
    %c0_51 = arith.constant 0 : index
    %c0_52 = arith.constant 0 : index
    %c0_53 = arith.constant 0 : index
    %93 = vector.load %arg8[%c0_51, %c0_52, %c0_53] : memref<8x2x64xf32, #tpu.memory_space<vmem>>, vector<8x2x64xf32>
    %c0_54 = arith.constant 0 : index
    %c0_55 = arith.constant 0 : index
    %94 = vector.load %arg4[%c0_54, %c0_55] : memref<64x1xf32, #tpu.memory_space<vmem>>, vector<64x1xf32>
    %95 = vector.shape_cast %94 : vector<64x1xf32> to vector<1x1x64xf32>
    %96 = vector.broadcast %95 : vector<1x1x64xf32> to vector<8x2x64xf32>
    %97 = arith.mulf %93, %96 : vector<8x2x64xf32>
    %cst_56 = arith.constant dense<0.000000e+00> : vector<8x2xf32>
    %98 = vector.multi_reduction <add>, %97, %cst_56 [2] : vector<8x2x64xf32> to vector<8x2xf32>
    %99 = vector.shape_cast %98 : vector<8x2xf32> to vector<8x2x1xf32>
    %c0_57 = arith.constant 0 : index
    %c0_58 = arith.constant 0 : index
    %100 = vector.load %arg5[%c0_57, %c0_58] : memref<1x1xf32, #tpu.memory_space<vmem>>, vector<1x1xf32>
    %101 = vector.shape_cast %100 : vector<1x1xf32> to vector<1x1x1xf32>
    %102 = vector.broadcast %101 : vector<1x1x1xf32> to vector<8x2x1xf32>
    %103 = arith.addf %99, %102 : vector<8x2x1xf32>
    %c0_59 = arith.constant 0 : index
    %c0_60 = arith.constant 0 : index
    %c0_61 = arith.constant 0 : index
    %104 = vector.load %arg6[%c0_59, %c0_60, %c0_61] : memref<8x2x1xf32, #tpu.memory_space<vmem>>, vector<8x2x1xf32>
    tpu.vector_store %arg6[%c0_59, %c0_60, %c0_61], %103 {strides = array<i32>} : memref<8x2x1xf32, #tpu.memory_space<vmem>>, vector<8x2x1xf32>,
    return
  }
}

</mosaic_0001>

<llo_original>
// kernel: tpu_custom_call.1
$region0: #{tpu_custom_call.1}
  #allocation0 [shape = 'u32[]', space=smem, size = 0x4, offset = 0x4, fixed_abs, tag = 'smem constant byte address 0x4 - core index']
  #allocation1 [shape = 'u32[144,128]{1,0:T(1,128)}', space=vmem, size = 0x12000, scoped, tag = 'internal scratch']
  #allocation2 [shape = 'f32[8,2,64]{2,1,0:T(2,128)}', space=vmem, size = 0x2000, scoped, tag = 'scratch operand']
  #allocation3 [shape = 'f32[8,2,64]{2,1,0:T(2,128)}', space=vmem, size = 0x2000, scoped, tag = 'scratch operand']
  #allocation4 [shape = 'f32[1,1]{1,0:T(1,128)S(1)}', space=vmem, size = 0x200, scoped, tag = 'scoped memory for tpu_custom_call.1']
  %s0 = inlined_call_operand.vmem [shape: f32[8,2,1], index: 0, kind: input, shape index: {}]
  %s1 = inlined_call_operand.vmem [shape: f32[1,64], index: 1, kind: input, shape index: {}]
  %s2 = inlined_call_operand.vmem [shape: f32[64,64], index: 2, kind: input, shape index: {}]
  %s3 = inlined_call_operand.vmem [shape: f32[1,64], index: 3, kind: input, shape index: {}]
  %s4 = inlined_call_operand.vmem [shape: f32[64,1], index: 4, kind: input, shape index: {}]
  %s5 = inlined_call_operand.<no memory space> [shape: f32[1,1], index: 5, kind: input, shape index: {}]
  %s6 = inlined_call_operand.vmem [shape: f32[8,2,1], index: 6, kind: output, shape index: {}]
  %s7 = sld [smem:[#allocation0]]
  $region34: #{tpu_custom_call.1} parent=0
    _
  %s9 = ssub.s32 1, %s7
  %s10 = scalar_select 0, %s9, %s7
  %v11 = vstv %s5
  %12 = vst [vmem:[#allocation4] sm:$0x1] %v11
  // Predicated region
  $region2: #{tpu_custom_call.1} parent=0 // pred_check
    _
  $region3: #{tpu_custom_call.1} parent=0 // pred_check_branch
    %14 = sbr.rel (0) target = $region5
  $region4: #{tpu_custom_call.1} parent=0 // pred_region
    _
  $region5: #{tpu_custom_call.1} parent=0 // pred_fallthru
    _
  // Predicated region
  $region6: #{tpu_custom_call.1} parent=0 // pred_check
    _
  $region7: #{tpu_custom_call.1} parent=0 // pred_check_branch
    %16 = sbr.rel (0) target = $region9
  $region8: #{tpu_custom_call.1} parent=0 // pred_region
    _
  $region9: #{tpu_custom_call.1} parent=0 // pred_fallthru
    _
  // Predicated region
  $region10: #{tpu_custom_call.1} parent=0 // pred_check
    _
  $region11: #{tpu_custom_call.1} parent=0 // pred_check_branch
    %18 = sbr.rel (0) target = $region13
  $region12: #{tpu_custom_call.1} parent=0 // pred_region
    _
  $region13: #{tpu_custom_call.1} parent=0 // pred_fallthru
    _
  // Predicated region
  $region14: #{tpu_custom_call.1} parent=0 // pred_check
    _
  $region15: #{tpu_custom_call.1} parent=0 // pred_check_branch
    %20 = sbr.rel (0) target = $region17
  $region16: #{tpu_custom_call.1} parent=0 // pred_region
    _
  $region17: #{tpu_custom_call.1} parent=0 // pred_fallthru
    _
  // Predicated region
  $region18: #{tpu_custom_call.1} parent=0 // pred_check
    _
  $region19: #{tpu_custom_call.1} parent=0 // pred_check_branch
    %22 = sbr.rel (0) target = $region21
  $region20: #{tpu_custom_call.1} parent=0 // pred_region
    _
  $region21: #{tpu_custom_call.1} parent=0 // pred_fallthru
    _
  // Predicated region
  $region22: #{tpu_custom_call.1} parent=0 // pred_check
    _
  $region23: #{tpu_custom_call.1} parent=0 // pred_check_branch
    %24 = sbr.rel (0) target = $region25
  $region24: #{tpu_custom_call.1} parent=0 // pred_region
    _
  $region25: #{tpu_custom_call.1} parent=0 // pred_fallthru
    _
  %v25 = vld [vmem:[%s3] sm:$0x1]
  %v26 = vld [vmem:[%s0] sm:$0x3]
  %v27 = vld [vmem:[%s0 + $0x2] sm:$0x3]
  %v28 = vld [vmem:[%s0 + $0x4] sm:$0x3]
  %v29 = vld [vmem:[%s0 + $0x6] sm:$0x3]
  %v30 = vld [vmem:[%s0 + $0x8] sm:$0x3]
  %v31 = vld [vmem:[%s0 + $0xa] sm:$0x3]
  %v32 = vld [vmem:[%s0 + $0xc] sm:$0x3]
  %v33 = vld [vmem:[%s0 + $0xe] sm:$0x3]
  %v34 = vld [vmem:[%s1] sm:$0x1]
  %36 = vset.pattern.permute.xlu0 0
  %37 = vperm.xlu0 %36, %v26
  %v38 = vpop.permute.xlu0 %37
  %41 = vset.pattern.permute.xlu0 0
  %42 = vperm.xlu0 %41, %v27
  %v43 = vpop.permute.xlu0 %42
  %46 = vset.pattern.permute.xlu0 0
  %47 = vperm.xlu0 %46, %v28
  %v48 = vpop.permute.xlu0 %47
  %51 = vset.pattern.permute.xlu0 0
  %52 = vperm.xlu0 %51, %v29
  %v53 = vpop.permute.xlu0 %52
  %56 = vset.pattern.permute.xlu0 0
  %57 = vperm.xlu0 %56, %v30
  %v58 = vpop.permute.xlu0 %57
  %61 = vset.pattern.permute.xlu0 0
  %62 = vperm.xlu0 %61, %v31
  %v63 = vpop.permute.xlu0 %62
  %66 = vset.pattern.permute.xlu0 0
  %67 = vperm.xlu0 %66, %v32
  %v68 = vpop.permute.xlu0 %67
  %71 = vset.pattern.permute.xlu0 0
  %72 = vperm.xlu0 %71, %v33
  %v73 = vpop.permute.xlu0 %72
  %v76 = vlaneseq
  %v77 = vshrl.u32 %v76, 7
  %v78 = vsub.s32 0, %v77
  %v79 = vrot.slane %v34, %v78
  %v81 = vmul.f32 %v38, %v79
  %v82 = vmul.f32 %v43, %v79
  %v83 = vmul.f32 %v48, %v79
  %v84 = vmul.f32 %v53, %v79
  %v85 = vmul.f32 %v58, %v79
  %v86 = vmul.f32 %v63, %v79
  %v87 = vmul.f32 %v68, %v79
  %v88 = vmul.f32 %v73, %v79
  %v90 = vlaneseq
  %v91 = vshrl.u32 %v90, 7
  %v92 = vsub.s32 0, %v91
  %v93 = vrot.slane %v25, %v92
  %v95 = vadd.f32 %v81, %v93
  %v96 = vadd.f32 %v82, %v93
  %v97 = vadd.f32 %v83, %v93
  %v98 = vadd.f32 %v84, %v93
  %v99 = vadd.f32 %v85, %v93
  %v100 = vadd.f32 %v86, %v93
  %v101 = vadd.f32 %v87, %v93
  %v102 = vadd.f32 %v88, %v93
  %vm103 = vcmask 517120
  %104 = vst.msk [vmem:[#allocation2] sm:$0x3] %vm103, %v95
  %105 = vst.msk [vmem:[#allocation2 + $0x2] sm:$0x3] %vm103, %v96
  %106 = vst.msk [vmem:[#allocation2 + $0x4] sm:$0x3] %vm103, %v97
  %107 = vst.msk [vmem:[#allocation2 + $0x6] sm:$0x3] %vm103, %v98
  %108 = vst.msk [vmem:[#allocation2 + $0x8] sm:$0x3] %vm103, %v99
  %109 = vst.msk [vmem:[#allocation2 + $0xa] sm:$0x3] %vm103, %v100
  %110 = vst.msk [vmem:[#allocation2 + $0xc] sm:$0x3] %vm103, %v101
  %111 = vst.msk [vmem:[#allocation2 + $0xe] sm:$0x3] %vm103, %v102
  %v112 = vld [vmem:[%s2] sm:$0xff]
  %v113 = vld [vmem:[%s2 + $0x8] sm:$0xff]
  %v114 = vld [vmem:[%s2 + $0x10] sm:$0xff]
  %v115 = vld [vmem:[%s2 + $0x18] sm:$0xff]
  %v116 = vld [vmem:[%s2 + $0x20] sm:$0xff]
  %v117 = vld [vmem:[%s2 + $0x28] sm:$0xff]
  %v118 = vld [vmem:[%s2 + $0x30] sm:$0xff]
  %v119 = vld [vmem:[%s2 + $0x38] sm:$0xff]
  %v120 = vld [vmem:[#allocation2] sm:$0x3]
  %vm121 = vcmask 523264
  %v123 = vsel %vm121, 0.0, 0
  %125 = vmatprep.subr.mxu0 0.0
  %126 = vmatpush1.msra.mxu0 0.0
  %127 = vmatprep.subr.mxu0 0.0
  %128 = vmatpush1.msra.mxu0 0.0
  %129 = vmatprep.subr.mxu0 0.0
  %130 = vmatpush1.msra.mxu0 0.0
  %131 = vmatprep.subr.mxu0 0.0
  %132 = vmatpush1.msra.mxu0 0.0
  %133 = vmatprep.subr.mxu0 0.0
  %134 = vmatpush1.msra.mxu0 0.0
  %135 = vmatprep.subr.mxu0 0.0
  %136 = vmatpush1.msra.mxu0 0.0
  %137 = vmatprep.subr.mxu0 0.0
  %138 = vmatpush1.msra.mxu0 0.0
  %139 = vmatprep.subr.mxu0 0.0
  %140 = vmatpush1.msra.mxu0 0.0
  %141 = vmatprep.subr.mxu0 0.0
  %142 = vmatpush1.msra.mxu0 %v119
  %143 = vmatprep.subr.mxu0 0.0
  %144 = vmatpush1.msra.mxu0 %v118
  %145 = vmatprep.subr.mxu0 0.0
  %146 = vmatpush1.msra.mxu0 %v117
  %147 = vmatprep.subr.mxu0 0.0
  %148 = vmatpush1.msra.mxu0 %v116
  %149 = vmatprep.subr.mxu0 0.0
  %150 = vmatpush1.msra.mxu0 %v115
  %151 = vmatprep.subr.mxu0 0.0
  %152 = vmatpush1.msra.mxu0 %v114
  %153 = vmatprep.subr.mxu0 0.0
  %154 = vmatpush1.msra.mxu0 %v113
  %155 = vmatprep.subr.mxu0 0.0
  %156 = vmatpush1.msra.mxu0 %v112
  %157 = vmatprep.subr.mxu0 0.0
  %158 = vmatpush2.msra.mxu0 0.0
  %159 = vmatprep.subr.mxu0 0.0
  %160 = vmatpush2.msra.mxu0 0.0
  %161 = vmatprep.subr.mxu0 0.0
  %162 = vmatpush2.msra.mxu0 0.0
  %163 = vmatprep.subr.mxu0 0.0
  %164 = vmatpush2.msra.mxu0 0.0
  %165 = vmatprep.subr.mxu0 0.0
  %166 = vmatpush2.msra.mxu0 0.0
  %167 = vmatprep.subr.mxu0 0.0
  %168 = vmatpush2.msra.mxu0 0.0
  %169 = vmatprep.subr.mxu0 0.0
  %170 = vmatpush2.msra.mxu0 0.0
  %171 = vmatprep.subr.mxu0 0.0
  %172 = vmatpush2.msra.mxu0 0.0
  %173 = vmatprep.subr.mxu0 0.0
  %174 = vmatpush2.msra.mxu0 0.0
  %175 = vmatprep.subr.mxu0 0.0
  %176 = vmatpush2.msra.mxu0 0.0
  %177 = vmatprep.subr.mxu0 0.0
  %178 = vmatpush2.msra.mxu0 0.0
  %179 = vmatprep.subr.mxu0 0.0
  %180 = vmatpush2.msra.mxu0 0.0
  %181 = vmatprep.subr.mxu0 0.0
  %182 = vmatpush2.msra.mxu0 0.0
  %183 = vmatprep.subr.mxu0 0.0
  %184 = vmatpush2.msra.mxu0 0.0
  %185 = vmatprep.subr.mxu0 0.0
  %186 = vmatpush2.msra.mxu0 0.0
  %187 = vmatprep.subr.mxu0 0.0
  %188 = vmatpush2.msra.mxu0 0.0
  %189 = vmatprep.mubr.f32.mxu0 0.0
  %190 = vmatmul.mubr.f32.gmra.mxu0 %v123
  %v191 = vpop.f32.mrf.mxu0
  %v192 = vadd.f32 0.0, %v191
  %v193 = vpop.f32.mrf.mxu0
  %194 = vdwg.mxu0
  %v195 = vadd.f32 %v120, %v192
  %v196 = vtanh.pop %v195
  %197 = vst.msk [vmem:[#allocation3] sm:$0x3] %vm103, %v196
  %s198 = scalar_lea.vmem [#allocation2], 2
  %v199 = vld [vmem:[%s198] sm:$0x3]
  %v201 = vsel %vm121, %v196, 0
  %203 = vmatprep.subr.mxu0 0.0
  %204 = vmatpush1.msra.mxu0 0.0
  %205 = vmatprep.subr.mxu0 0.0
  %206 = vmatpush1.msra.mxu0 0.0
  %207 = vmatprep.subr.mxu0 0.0
  %208 = vmatpush1.msra.mxu0 0.0
  %209 = vmatprep.subr.mxu0 0.0
  %210 = vmatpush1.msra.mxu0 0.0
  %211 = vmatprep.subr.mxu0 0.0
  %212 = vmatpush1.msra.mxu0 0.0
  %213 = vmatprep.subr.mxu0 0.0
  %214 = vmatpush1.msra.mxu0 0.0
  %215 = vmatprep.subr.mxu0 0.0
  %216 = vmatpush1.msra.mxu0 0.0
  %217 = vmatprep.subr.mxu0 0.0
  %218 = vmatpush1.msra.mxu0 0.0
  %219 = vmatprep.subr.mxu0 0.0
  %220 = vmatpush1.msra.mxu0 %v119
  %221 = vmatprep.subr.mxu0 0.0
  %222 = vmatpush1.msra.mxu0 %v118
  %223 = vmatprep.subr.mxu0 0.0
  %224 = vmatpush1.msra.mxu0 %v117
  %225 = vmatprep.subr.mxu0 0.0
  %226 = vmatpush1.msra.mxu0 %v116
  %227 = vmatprep.subr.mxu0 0.0
  %228 = vmatpush1.msra.mxu0 %v115
  %229 = vmatprep.subr.mxu0 0.0
  %230 = vmatpush1.msra.mxu0 %v114
  %231 = vmatprep.subr.mxu0 0.0
  %232 = vmatpush1.msra.mxu0 %v113
  %233 = vmatprep.subr.mxu0 0.0
  %234 = vmatpush1.msra.mxu0 %v112
  %235 = vmatprep.subr.mxu0 0.0
  %236 = vmatpush2.msra.mxu0 0.0
  %237 = vmatprep.subr.mxu0 0.0
  %238 = vmatpush2.msra.mxu0 0.0
  %239 = vmatprep.subr.mxu0 0.0
  %240 = vmatpush2.msra.mxu0 0.0
  %241 = vmatprep.subr.mxu0 0.0
  %242 = vmatpush2.msra.mxu0 0.0
  %243 = vmatprep.subr.mxu0 0.0
  %244 = vmatpush2.msra.mxu0 0.0
  %245 = vmatprep.subr.mxu0 0.0
  %246 = vmatpush2.msra.mxu0 0.0
  %247 = vmatprep.subr.mxu0 0.0
  %248 = vmatpush2.msra.mxu0 0.0
  %249 = vmatprep.subr.mxu0 0.0
  %250 = vmatpush2.msra.mxu0 0.0
  %251 = vmatprep.subr.mxu0 0.0
  %252 = vmatpush2.msra.mxu0 0.0
  %253 = vmatprep.subr.mxu0 0.0
  %254 = vmatpush2.msra.mxu0 0.0
  %255 = vmatprep.subr.mxu0 0.0
  %256 = vmatpush2.msra.mxu0 0.0
  %257 = vmatprep.subr.mxu0 0.0
  %258 = vmatpush2.msra.mxu0 0.0
  %259 = vmatprep.subr.mxu0 0.0
  %260 = vmatpush2.msra.mxu0 0.0
  %261 = vmatprep.subr.mxu0 0.0
  %262 = vmatpush2.msra.mxu0 0.0
  %263 = vmatprep.subr.mxu0 0.0
  %264 = vmatpush2.msra.mxu0 0.0
  %265 = vmatprep.subr.mxu0 0.0
  %266 = vmatpush2.msra.mxu0 0.0
  %267 = vmatprep.mubr.f32.mxu0 0.0
  %268 = vmatmul.mubr.f32.gmra.mxu0 %v201
  %v269 = vpop.f32.mrf.mxu0
  %v270 = vadd.f32 0.0, %v269
  %v271 = vpop.f32.mrf.mxu0
  %272 = vdwg.mxu0
  %v273 = vadd.f32 %v199, %v270
  %v274 = vtanh.pop %v273
  %s275 = scalar_lea.vmem [#allocation3], 2
  %276 = vst.msk [vmem:[%s275] sm:$0x3] %vm103, %v274
  %s277 = scalar_lea.vmem [#allocation2], 4
  %v278 = vld [vmem:[%s277] sm:$0x3]
  %v280 = vsel %vm121, %v274, 0
  %282 = vmatprep.subr.mxu0 0.0
  %283 = vmatpush1.msra.mxu0 0.0
  %284 = vmatprep.subr.mxu0 0.0
  %285 = vmatpush1.msra.mxu0 0.0
  %286 = vmatprep.subr.mxu0 0.0
  %287 = vmatpush1.msra.mxu0 0.0
  %288 = vmatprep.subr.mxu0 0.0
  %289 = vmatpush1.msra.mxu0 0.0
  %290 = vmatprep.subr.mxu0 0.0
  %291 = vmatpush1.msra.mxu0 0.0
  %292 = vmatprep.subr.mxu0 0.0
  %293 = vmatpush1.msra.mxu0 0.0
  %294 = vmatprep.subr.mxu0 0.0
  %295 = vmatpush1.msra.mxu0 0.0
  %296 = vmatprep.subr.mxu0 0.0
  %297 = vmatpush1.msra.mxu0 0.0
  %298 = vmatprep.subr.mxu0 0.0
  %299 = vmatpush1.msra.mxu0 %v119
  %300 = vmatprep.subr.mxu0 0.0
  %301 = vmatpush1.msra.mxu0 %v118
  %302 = vmatprep.subr.mxu0 0.0
  %303 = vmatpush1.msra.mxu0 %v117
  %304 = vmatprep.subr.mxu0 0.0
  %305 = vmatpush1.msra.mxu0 %v116
  %306 = vmatprep.subr.mxu0 0.0
  %307 = vmatpush1.msra.mxu0 %v115
  %308 = vmatprep.subr.mxu0 0.0
  %309 = vmatpush1.msra.mxu0 %v114
  %310 = vmatprep.subr.mxu0 0.0
  %311 = vmatpush1.msra.mxu0 %v113
  %312 = vmatprep.subr.mxu0 0.0
  %313 = vmatpush1.msra.mxu0 %v112
  %314 = vmatprep.subr.mxu0 0.0
  %315 = vmatpush2.msra.mxu0 0.0
  %316 = vmatprep.subr.mxu0 0.0
  %317 = vmatpush2.msra.mxu0 0.0
  %318 = vmatprep.subr.mxu0 0.0
  %319 = vmatpush2.msra.mxu0 0.0
  %320 = vmatprep.subr.mxu0 0.0
  %321 = vmatpush2.msra.mxu0 0.0
  %322 = vmatprep.subr.mxu0 0.0
  %323 = vmatpush2.msra.mxu0 0.0
  %324 = vmatprep.subr.mxu0 0.0
  %325 = vmatpush2.msra.mxu0 0.0
  %326 = vmatprep.subr.mxu0 0.0
  %327 = vmatpush2.msra.mxu0 0.0
  %328 = vmatprep.subr.mxu0 0.0
  %329 = vmatpush2.msra.mxu0 0.0
  %330 = vmatprep.subr.mxu0 0.0
  %331 = vmatpush2.msra.mxu0 0.0
  %332 = vmatprep.subr.mxu0 0.0
  %333 = vmatpush2.msra.mxu0 0.0
  %334 = vmatprep.subr.mxu0 0.0
  %335 = vmatpush2.msra.mxu0 0.0
  %336 = vmatprep.subr.mxu0 0.0
  %337 = vmatpush2.msra.mxu0 0.0
  %338 = vmatprep.subr.mxu0 0.0
  %339 = vmatpush2.msra.mxu0 0.0
  %340 = vmatprep.subr.mxu0 0.0
  %341 = vmatpush2.msra.mxu0 0.0
  %342 = vmatprep.subr.mxu0 0.0
  %343 = vmatpush2.msra.mxu0 0.0
  %344 = vmatprep.subr.mxu0 0.0
  %345 = vmatpush2.msra.mxu0 0.0
  %346 = vmatprep.mubr.f32.mxu0 0.0
  %347 = vmatmul.mubr.f32.gmra.mxu0 %v280
  %v348 = vpop.f32.mrf.mxu0
  %v349 = vadd.f32 0.0, %v348
  %v350 = vpop.f32.mrf.mxu0
  %351 = vdwg.mxu0
  %v352 = vadd.f32 %v278, %v349
  %v353 = vtanh.pop %v352
  %s354 = scalar_lea.vmem [#allocation3], 4
  %355 = vst.msk [vmem:[%s354] sm:$0x3] %vm103, %v353
  %s356 = scalar_lea.vmem [#allocation2], 6
  %v357 = vld [vmem:[%s356] sm:$0x3]
  %v359 = vsel %vm121, %v353, 0
  %361 = vmatprep.subr.mxu0 0.0
  %362 = vmatpush1.msra.mxu0 0.0
  %363 = vmatprep.subr.mxu0 0.0
  %364 = vmatpush1.msra.mxu0 0.0
  %365 = vmatprep.subr.mxu0 0.0
  %366 = vmatpush1.msra.mxu0 0.0
  %367 = vmatprep.subr.mxu0 0.0
  %368 = vmatpush1.msra.mxu0 0.0
  %369 = vmatprep.subr.mxu0 0.0
  %370 = vmatpush1.msra.mxu0 0.0
  %371 = vmatprep.subr.mxu0 0.0
  %372 = vmatpush1.msra.mxu0 0.0
  %373 = vmatprep.subr.mxu0 0.0
  %374 = vmatpush1.msra.mxu0 0.0
  %375 = vmatprep.subr.mxu0 0.0
  %376 = vmatpush1.msra.mxu0 0.0
  %377 = vmatprep.subr.mxu0 0.0
  %378 = vmatpush1.msra.mxu0 %v119
  %379 = vmatprep.subr.mxu0 0.0
  %380 = vmatpush1.msra.mxu0 %v118
  %381 = vmatprep.subr.mxu0 0.0
  %382 = vmatpush1.msra.mxu0 %v117
  %383 = vmatprep.subr.mxu0 0.0
  %384 = vmatpush1.msra.mxu0 %v116
  %385 = vmatprep.subr.mxu0 0.0
  %386 = vmatpush1.msra.mxu0 %v115
  %387 = vmatprep.subr.mxu0 0.0
  %388 = vmatpush1.msra.mxu0 %v114
  %389 = vmatprep.subr.mxu0 0.0
  %390 = vmatpush1.msra.mxu0 %v113
  %391 = vmatprep.subr.mxu0 0.0
  %392 = vmatpush1.msra.mxu0 %v112
  %393 = vmatprep.subr.mxu0 0.0
  %394 = vmatpush2.msra.mxu0 0.0
  %395 = vmatprep.subr.mxu0 0.0
  %396 = vmatpush2.msra.mxu0 0.0
  %397 = vmatprep.subr.mxu0 0.0
  %398 = vmatpush2.msra.mxu0 0.0
  %399 = vmatprep.subr.mxu0 0.0
  %400 = vmatpush2.msra.mxu0 0.0
  %401 = vmatprep.subr.mxu0 0.0
  %402 = vmatpush2.msra.mxu0 0.0
  %403 = vmatprep.subr.mxu0 0.0
  %404 = vmatpush2.msra.mxu0 0.0
  %405 = vmatprep.subr.mxu0 0.0
  %406 = vmatpush2.msra.mxu0 0.0
  %407 = vmatprep.subr.mxu0 0.0
  %408 = vmatpush2.msra.mxu0 0.0
  %409 = vmatprep.subr.mxu0 0.0
  %410 = vmatpush2.msra.mxu0 0.0
  %411 = vmatprep.subr.mxu0 0.0
  %412 = vmatpush2.msra.mxu0 0.0
  %413 = vmatprep.subr.mxu0 0.0
  %414 = vmatpush2.msra.mxu0 0.0
  %415 = vmatprep.subr.mxu0 0.0
  %416 = vmatpush2.msra.mxu0 0.0
  %417 = vmatprep.subr.mxu0 0.0
  %418 = vmatpush2.msra.mxu0 0.0
  %419 = vmatprep.subr.mxu0 0.0
  %420 = vmatpush2.msra.mxu0 0.0
  %421 = vmatprep.subr.mxu0 0.0
  %422 = vmatpush2.msra.mxu0 0.0
  %423 = vmatprep.subr.mxu0 0.0
  %424 = vmatpush2.msra.mxu0 0.0
  %425 = vmatprep.mubr.f32.mxu0 0.0
  %426 = vmatmul.mubr.f32.gmra.mxu0 %v359
  %v427 = vpop.f32.mrf.mxu0
  %v428 = vadd.f32 0.0, %v427
  %v429 = vpop.f32.mrf.mxu0
  %430 = vdwg.mxu0
  %v431 = vadd.f32 %v357, %v428
  %v432 = vtanh.pop %v431
  %s433 = scalar_lea.vmem [#allocation3], 6
  %434 = vst.msk [vmem:[%s433] sm:$0x3] %vm103, %v432
  %s435 = scalar_lea.vmem [#allocation2], 8
  %v436 = vld [vmem:[%s435] sm:$0x3]
  %v438 = vsel %vm121, %v432, 0
  %440 = vmatprep.subr.mxu0 0.0
  %441 = vmatpush1.msra.mxu0 0.0
  %442 = vmatprep.subr.mxu0 0.0
  %443 = vmatpush1.msra.mxu0 0.0
  %444 = vmatprep.subr.mxu0 0.0
  %445 = vmatpush1.msra.mxu0 0.0
  %446 = vmatprep.subr.mxu0 0.0
  %447 = vmatpush1.msra.mxu0 0.0
  %448 = vmatprep.subr.mxu0 0.0
  %449 = vmatpush1.msra.mxu0 0.0
  %450 = vmatprep.subr.mxu0 0.0
  %451 = vmatpush1.msra.mxu0 0.0
  %452 = vmatprep.subr.mxu0 0.0
  %453 = vmatpush1.msra.mxu0 0.0
  %454 = vmatprep.subr.mxu0 0.0
  %455 = vmatpush1.msra.mxu0 0.0
  %456 = vmatprep.subr.mxu0 0.0
  %457 = vmatpush1.msra.mxu0 %v119
  %458 = vmatprep.subr.mxu0 0.0
  %459 = vmatpush1.msra.mxu0 %v118
  %460 = vmatprep.subr.mxu0 0.0
  %461 = vmatpush1.msra.mxu0 %v117
  %462 = vmatprep.subr.mxu0 0.0
  %463 = vmatpush1.msra.mxu0 %v116
  %464 = vmatprep.subr.mxu0 0.0
  %465 = vmatpush1.msra.mxu0 %v115
  %466 = vmatprep.subr.mxu0 0.0
  %467 = vmatpush1.msra.mxu0 %v114
  %468 = vmatprep.subr.mxu0 0.0
  %469 = vmatpush1.msra.mxu0 %v113
  %470 = vmatprep.subr.mxu0 0.0
  %471 = vmatpush1.msra.mxu0 %v112
  %472 = vmatprep.subr.mxu0 0.0
  %473 = vmatpush2.msra.mxu0 0.0
  %474 = vmatprep.subr.mxu0 0.0
  %475 = vmatpush2.msra.mxu0 0.0
  %476 = vmatprep.subr.mxu0 0.0
  %477 = vmatpush2.msra.mxu0 0.0
  %478 = vmatprep.subr.mxu0 0.0
  %479 = vmatpush2.msra.mxu0 0.0
  %480 = vmatprep.subr.mxu0 0.0
  %481 = vmatpush2.msra.mxu0 0.0
  %482 = vmatprep.subr.mxu0 0.0
  %483 = vmatpush2.msra.mxu0 0.0
  %484 = vmatprep.subr.mxu0 0.0
  %485 = vmatpush2.msra.mxu0 0.0
  %486 = vmatprep.subr.mxu0 0.0
  %487 = vmatpush2.msra.mxu0 0.0
  %488 = vmatprep.subr.mxu0 0.0
  %489 = vmatpush2.msra.mxu0 0.0
  %490 = vmatprep.subr.mxu0 0.0
  %491 = vmatpush2.msra.mxu0 0.0
  %492 = vmatprep.subr.mxu0 0.0
  %493 = vmatpush2.msra.mxu0 0.0
  %494 = vmatprep.subr.mxu0 0.0
  %495 = vmatpush2.msra.mxu0 0.0
  %496 = vmatprep.subr.mxu0 0.0
  %497 = vmatpush2.msra.mxu0 0.0
  %498 = vmatprep.subr.mxu0 0.0
  %499 = vmatpush2.msra.mxu0 0.0
  %500 = vmatprep.subr.mxu0 0.0
  %501 = vmatpush2.msra.mxu0 0.0
  %502 = vmatprep.subr.mxu0 0.0
  %503 = vmatpush2.msra.mxu0 0.0
  %504 = vmatprep.mubr.f32.mxu0 0.0
  %505 = vmatmul.mubr.f32.gmra.mxu0 %v438
  %v506 = vpop.f32.mrf.mxu0
  %v507 = vadd.f32 0.0, %v506
  %v508 = vpop.f32.mrf.mxu0
  %509 = vdwg.mxu0
  %v510 = vadd.f32 %v436, %v507
  %v511 = vtanh.pop %v510
  %s512 = scalar_lea.vmem [#allocation3], 8
  %513 = vst.msk [vmem:[%s512] sm:$0x3] %vm103, %v511
  %s514 = scalar_lea.vmem [#allocation2], 10
  %v515 = vld [vmem:[%s514] sm:$0x3]
  %v517 = vsel %vm121, %v511, 0
  %519 = vmatprep.subr.mxu0 0.0
  %520 = vmatpush1.msra.mxu0 0.0
  %521 = vmatprep.subr.mxu0 0.0
  %522 = vmatpush1.msra.mxu0 0.0
  %523 = vmatprep.subr.mxu0 0.0
  %524 = vmatpush1.msra.mxu0 0.0
  %525 = vmatprep.subr.mxu0 0.0
  %526 = vmatpush1.msra.mxu0 0.0
  %527 = vmatprep.subr.mxu0 0.0
  %528 = vmatpush1.msra.mxu0 0.0
  %529 = vmatprep.subr.mxu0 0.0
  %530 = vmatpush1.msra.mxu0 0.0
  %531 = vmatprep.subr.mxu0 0.0
  %532 = vmatpush1.msra.mxu0 0.0
  %533 = vmatprep.subr.mxu0 0.0
  %534 = vmatpush1.msra.mxu0 0.0
  %535 = vmatprep.subr.mxu0 0.0
  %536 = vmatpush1.msra.mxu0 %v119
  %537 = vmatprep.subr.mxu0 0.0
  %538 = vmatpush1.msra.mxu0 %v118
  %539 = vmatprep.subr.mxu0 0.0
  %540 = vmatpush1.msra.mxu0 %v117
  %541 = vmatprep.subr.mxu0 0.0
  %542 = vmatpush1.msra.mxu0 %v116
  %543 = vmatprep.subr.mxu0 0.0
  %544 = vmatpush1.msra.mxu0 %v115
  %545 = vmatprep.subr.mxu0 0.0
  %546 = vmatpush1.msra.mxu0 %v114
  %547 = vmatprep.subr.mxu0 0.0
  %548 = vmatpush1.msra.mxu0 %v113
  %549 = vmatprep.subr.mxu0 0.0
  %550 = vmatpush1.msra.mxu0 %v112
  %551 = vmatprep.subr.mxu0 0.0
  %552 = vmatpush2.msra.mxu0 0.0
  %553 = vmatprep.subr.mxu0 0.0
  %554 = vmatpush2.msra.mxu0 0.0
  %555 = vmatprep.subr.mxu0 0.0
  %556 = vmatpush2.msra.mxu0 0.0
  %557 = vmatprep.subr.mxu0 0.0
  %558 = vmatpush2.msra.mxu0 0.0
  %559 = vmatprep.subr.mxu0 0.0
  %560 = vmatpush2.msra.mxu0 0.0
  %561 = vmatprep.subr.mxu0 0.0
  %562 = vmatpush2.msra.mxu0 0.0
  %563 = vmatprep.subr.mxu0 0.0
  %564 = vmatpush2.msra.mxu0 0.0
  %565 = vmatprep.subr.mxu0 0.0
  %566 = vmatpush2.msra.mxu0 0.0
  %567 = vmatprep.subr.mxu0 0.0
  %568 = vmatpush2.msra.mxu0 0.0
  %569 = vmatprep.subr.mxu0 0.0
  %570 = vmatpush2.msra.mxu0 0.0
  %571 = vmatprep.subr.mxu0 0.0
  %572 = vmatpush2.msra.mxu0 0.0
  %573 = vmatprep.subr.mxu0 0.0
  %574 = vmatpush2.msra.mxu0 0.0
  %575 = vmatprep.subr.mxu0 0.0
  %576 = vmatpush2.msra.mxu0 0.0
  %577 = vmatprep.subr.mxu0 0.0
  %578 = vmatpush2.msra.mxu0 0.0
  %579 = vmatprep.subr.mxu0 0.0
  %580 = vmatpush2.msra.mxu0 0.0
  %581 = vmatprep.subr.mxu0 0.0
  %582 = vmatpush2.msra.mxu0 0.0
  %583 = vmatprep.mubr.f32.mxu0 0.0
  %584 = vmatmul.mubr.f32.gmra.mxu0 %v517
  %v585 = vpop.f32.mrf.mxu0
  %v586 = vadd.f32 0.0, %v585
  %v587 = vpop.f32.mrf.mxu0
  %588 = vdwg.mxu0
  %v589 = vadd.f32 %v515, %v586
  %v590 = vtanh.pop %v589
  %s591 = scalar_lea.vmem [#allocation3], 10
  %592 = vst.msk [vmem:[%s591] sm:$0x3] %vm103, %v590
  %s593 = scalar_lea.vmem [#allocation2], 12
  %v594 = vld [vmem:[%s593] sm:$0x3]
  %v596 = vsel %vm121, %v590, 0
  %598 = vmatprep.subr.mxu0 0.0
  %599 = vmatpush1.msra.mxu0 0.0
  %600 = vmatprep.subr.mxu0 0.0
  %601 = vmatpush1.msra.mxu0 0.0
  %602 = vmatprep.subr.mxu0 0.0
  %603 = vmatpush1.msra.mxu0 0.0
  %604 = vmatprep.subr.mxu0 0.0
  %605 = vmatpush1.msra.mxu0 0.0
  %606 = vmatprep.subr.mxu0 0.0
  %607 = vmatpush1.msra.mxu0 0.0
  %608 = vmatprep.subr.mxu0 0.0
  %609 = vmatpush1.msra.mxu0 0.0
  %610 = vmatprep.subr.mxu0 0.0
  %611 = vmatpush1.msra.mxu0 0.0
  %612 = vmatprep.subr.mxu0 0.0
  %613 = vmatpush1.msra.mxu0 0.0
  %614 = vmatprep.subr.mxu0 0.0
  %615 = vmatpush1.msra.mxu0 %v119
  %616 = vmatprep.subr.mxu0 0.0
  %617 = vmatpush1.msra.mxu0 %v118
  %618 = vmatprep.subr.mxu0 0.0
  %619 = vmatpush1.msra.mxu0 %v117
  %620 = vmatprep.subr.mxu0 0.0
  %621 = vmatpush1.msra.mxu0 %v116
  %622 = vmatprep.subr.mxu0 0.0
  %623 = vmatpush1.msra.mxu0 %v115
  %624 = vmatprep.subr.mxu0 0.0
  %625 = vmatpush1.msra.mxu0 %v114
  %626 = vmatprep.subr.mxu0 0.0
  %627 = vmatpush1.msra.mxu0 %v113
  %628 = vmatprep.subr.mxu0 0.0
  %629 = vmatpush1.msra.mxu0 %v112
  %630 = vmatprep.subr.mxu0 0.0
  %631 = vmatpush2.msra.mxu0 0.0
  %632 = vmatprep.subr.mxu0 0.0
  %633 = vmatpush2.msra.mxu0 0.0
  %634 = vmatprep.subr.mxu0 0.0
  %635 = vmatpush2.msra.mxu0 0.0
  %636 = vmatprep.subr.mxu0 0.0
  %637 = vmatpush2.msra.mxu0 0.0
  %638 = vmatprep.subr.mxu0 0.0
  %639 = vmatpush2.msra.mxu0 0.0
  %640 = vmatprep.subr.mxu0 0.0
  %641 = vmatpush2.msra.mxu0 0.0
  %642 = vmatprep.subr.mxu0 0.0
  %643 = vmatpush2.msra.mxu0 0.0
  %644 = vmatprep.subr.mxu0 0.0
  %645 = vmatpush2.msra.mxu0 0.0
  %646 = vmatprep.subr.mxu0 0.0
  %647 = vmatpush2.msra.mxu0 0.0
  %648 = vmatprep.subr.mxu0 0.0
  %649 = vmatpush2.msra.mxu0 0.0
  %650 = vmatprep.subr.mxu0 0.0
  %651 = vmatpush2.msra.mxu0 0.0
  %652 = vmatprep.subr.mxu0 0.0
  %653 = vmatpush2.msra.mxu0 0.0
  %654 = vmatprep.subr.mxu0 0.0
  %655 = vmatpush2.msra.mxu0 0.0
  %656 = vmatprep.subr.mxu0 0.0
  %657 = vmatpush2.msra.mxu0 0.0
  %658 = vmatprep.subr.mxu0 0.0
  %659 = vmatpush2.msra.mxu0 0.0
  %660 = vmatprep.subr.mxu0 0.0
  %661 = vmatpush2.msra.mxu0 0.0
  %662 = vmatprep.mubr.f32.mxu0 0.0
  %663 = vmatmul.mubr.f32.gmra.mxu0 %v596
  %v664 = vpop.f32.mrf.mxu0
  %v665 = vadd.f32 0.0, %v664
  %v666 = vpop.f32.mrf.mxu0
  %667 = vdwg.mxu0
  %v668 = vadd.f32 %v594, %v665
  %v669 = vtanh.pop %v668
  %s670 = scalar_lea.vmem [#allocation3], 12
  %671 = vst.msk [vmem:[%s670] sm:$0x3] %vm103, %v669
  %s672 = scalar_lea.vmem [#allocation2], 14
  %v673 = vld [vmem:[%s672] sm:$0x3]
  %v675 = vsel %vm121, %v669, 0
  %677 = vmatprep.subr.mxu0 0.0
  %678 = vmatpush1.msra.mxu0 0.0
  %679 = vmatprep.subr.mxu0 0.0
  %680 = vmatpush1.msra.mxu0 0.0
  %681 = vmatprep.subr.mxu0 0.0
  %682 = vmatpush1.msra.mxu0 0.0
  %683 = vmatprep.subr.mxu0 0.0
  %684 = vmatpush1.msra.mxu0 0.0
  %685 = vmatprep.subr.mxu0 0.0
  %686 = vmatpush1.msra.mxu0 0.0
  %687 = vmatprep.subr.mxu0 0.0
  %688 = vmatpush1.msra.mxu0 0.0
  %689 = vmatprep.subr.mxu0 0.0
  %690 = vmatpush1.msra.mxu0 0.0
  %691 = vmatprep.subr.mxu0 0.0
  %692 = vmatpush1.msra.mxu0 0.0
  %693 = vmatprep.subr.mxu0 0.0
  %694 = vmatpush1.msra.mxu0 %v119
  %695 = vmatprep.subr.mxu0 0.0
  %696 = vmatpush1.msra.mxu0 %v118
  %697 = vmatprep.subr.mxu0 0.0
  %698 = vmatpush1.msra.mxu0 %v117
  %699 = vmatprep.subr.mxu0 0.0
  %700 = vmatpush1.msra.mxu0 %v116
  %701 = vmatprep.subr.mxu0 0.0
  %702 = vmatpush1.msra.mxu0 %v115
  %703 = vmatprep.subr.mxu0 0.0
  %704 = vmatpush1.msra.mxu0 %v114
  %705 = vmatprep.subr.mxu0 0.0
  %706 = vmatpush1.msra.mxu0 %v113
  %707 = vmatprep.subr.mxu0 0.0
  %708 = vmatpush1.msra.mxu0 %v112
  %709 = vmatprep.subr.mxu0 0.0
  %710 = vmatpush2.msra.mxu0 0.0
  %711 = vmatprep.subr.mxu0 0.0
  %712 = vmatpush2.msra.mxu0 0.0
  %713 = vmatprep.subr.mxu0 0.0
  %714 = vmatpush2.msra.mxu0 0.0
  %715 = vmatprep.subr.mxu0 0.0
  %716 = vmatpush2.msra.mxu0 0.0
  %717 = vmatprep.subr.mxu0 0.0
  %718 = vmatpush2.msra.mxu0 0.0
  %719 = vmatprep.subr.mxu0 0.0
  %720 = vmatpush2.msra.mxu0 0.0
  %721 = vmatprep.subr.mxu0 0.0
  %722 = vmatpush2.msra.mxu0 0.0
  %723 = vmatprep.subr.mxu0 0.0
  %724 = vmatpush2.msra.mxu0 0.0
  %725 = vmatprep.subr.mxu0 0.0
  %726 = vmatpush2.msra.mxu0 0.0
  %727 = vmatprep.subr.mxu0 0.0
  %728 = vmatpush2.msra.mxu0 0.0
  %729 = vmatprep.subr.mxu0 0.0
  %730 = vmatpush2.msra.mxu0 0.0
  %731 = vmatprep.subr.mxu0 0.0
  %732 = vmatpush2.msra.mxu0 0.0
  %733 = vmatprep.subr.mxu0 0.0
  %734 = vmatpush2.msra.mxu0 0.0
  %735 = vmatprep.subr.mxu0 0.0
  %736 = vmatpush2.msra.mxu0 0.0
  %737 = vmatprep.subr.mxu0 0.0
  %738 = vmatpush2.msra.mxu0 0.0
  %739 = vmatprep.subr.mxu0 0.0
  %740 = vmatpush2.msra.mxu0 0.0
  %741 = vmatprep.mubr.f32.mxu0 0.0
  %742 = vmatmul.mubr.f32.gmra.mxu0 %v675
  %v743 = vpop.f32.mrf.mxu0
  %v744 = vadd.f32 0.0, %v743
  %v745 = vpop.f32.mrf.mxu0
  %746 = vdwg.mxu0
  %v747 = vadd.f32 %v673, %v744
  %v748 = vtanh.pop %v747
  %s749 = scalar_lea.vmem [#allocation3], 14
  %750 = vst.msk [vmem:[%s749] sm:$0x3] %vm103, %v748
  %v751 = vld [vmem:[#allocation3] sm:$0x3]
  %v752 = vld [vmem:[#allocation3 + $0x2] sm:$0x3]
  %v753 = vld [vmem:[#allocation3 + $0x4] sm:$0x3]
  %v754 = vld [vmem:[#allocation3 + $0x6] sm:$0x3]
  %v755 = vld [vmem:[#allocation3 + $0x8] sm:$0x3]
  %v756 = vld [vmem:[#allocation3 + $0xa] sm:$0x3]
  %v757 = vld [vmem:[#allocation3 + $0xc] sm:$0x3]
  %v758 = vld [vmem:[#allocation3 + $0xe] sm:$0x3]
  %v759 = vld [vmem:[%s4] sm:$0xff]
  %v760 = vld [vmem:[%s4 + $0x8] sm:$0xff]
  %v761 = vld [vmem:[%s4 + $0x10] sm:$0xff]
  %v762 = vld [vmem:[%s4 + $0x18] sm:$0xff]
  %v763 = vld [vmem:[%s4 + $0x20] sm:$0xff]
  %v764 = vld [vmem:[%s4 + $0x28] sm:$0xff]
  %v765 = vld [vmem:[%s4 + $0x30] sm:$0xff]
  %v766 = vld [vmem:[%s4 + $0x38] sm:$0xff]
  %775 = vset.pattern.permute.xlu0 0
  %776 = vperm.xlu0 %775, %v759
  %v777 = vpop.permute.xlu0 %776
  %778 = vset.pattern.permute.xlu0 0
  %779 = vperm.xlu0 %778, %v760
  %v780 = vpop.permute.xlu0 %779
  %781 = vset.pattern.permute.xlu0 0
  %782 = vperm.xlu0 %781, %v761
  %v783 = vpop.permute.xlu0 %782
  %784 = vset.pattern.permute.xlu0 0
  %785 = vperm.xlu0 %784, %v762
  %v786 = vpop.permute.xlu0 %785
  %787 = vset.pattern.permute.xlu0 0
  %788 = vperm.xlu0 %787, %v763
  %v789 = vpop.permute.xlu0 %788
  %790 = vset.pattern.permute.xlu0 0
  %791 = vperm.xlu0 %790, %v764
  %v792 = vpop.permute.xlu0 %791
  %793 = vset.pattern.permute.xlu0 0
  %794 = vperm.xlu0 %793, %v765
  %v795 = vpop.permute.xlu0 %794
  %796 = vset.pattern.permute.xlu0 0
  %797 = vperm.xlu0 %796, %v766
  %v798 = vpop.permute.xlu0 %797
  %v799 = vlaneseq
  %v800 = vand.u32 %v799, 127
  %v801 = vlaneseq
  %v802 = vshrl.u32 %v801, 7
  %v803 = vsub.s32 %v800, %v802
  %v804 = vrot.slane %v777, %v803
  %v805 = vadd.s32 %v800, 4294967288
  %v806 = vlaneseq
  %v807 = vshrl.u32 %v806, 7
  %v808 = vsub.s32 %v805, %v807
  %v809 = vrot.slane %v780, %v808
  %vm810 = vcmask 130112
  %v811 = vsel %vm810, %v809, %v804
  %v812 = vadd.s32 %v800, 4294967280
  %v813 = vlaneseq
  %v814 = vshrl.u32 %v813, 7
  %v815 = vsub.s32 %v812, %v814
  %v816 = vrot.slane %v783, %v815
  %vm817 = vcmask 195712
  %v818 = vsel %vm817, %v816, %v811
  %v819 = vadd.s32 %v800, 4294967272
  %v820 = vlaneseq
  %v821 = vshrl.u32 %v820, 7
  %v822 = vsub.s32 %v819, %v821
  %v823 = vrot.slane %v786, %v822
  %vm824 = vcmask 261312
  %v825 = vsel %vm824, %v823, %v818
  %v826 = vadd.s32 %v800, 4294967264
  %v827 = vlaneseq
  %v828 = vshrl.u32 %v827, 7
  %v829 = vsub.s32 %v826, %v828
  %v830 = vrot.slane %v789, %v829
  %vm831 = vcmask 326912
  %v832 = vsel %vm831, %v830, %v825
  %v833 = vadd.s32 %v800, 4294967256
  %v834 = vlaneseq
  %v835 = vshrl.u32 %v834, 7
  %v836 = vsub.s32 %v833, %v835
  %v837 = vrot.slane %v792, %v836
  %vm838 = vcmask 392512
  %v839 = vsel %vm838, %v837, %v832
  %v840 = vadd.s32 %v800, 4294967248
  %v841 = vlaneseq
  %v842 = vshrl.u32 %v841, 7
  %v843 = vsub.s32 %v840, %v842
  %v844 = vrot.slane %v795, %v843
  %vm845 = vcmask 458112
  %v846 = vsel %vm845, %v844, %v839
  %v847 = vadd.s32 %v800, 4294967240
  %v848 = vlaneseq
  %v849 = vshrl.u32 %v848, 7
  %v850 = vsub.s32 %v847, %v849
  %v851 = vrot.slane %v798, %v850
  %vm852 = vcmask 523712
  %v853 = vsel %vm852, %v851, %v846
  %v855 = vmul.f32 %v751, %v853
  %v856 = vmul.f32 %v752, %v853
  %v857 = vmul.f32 %v753, %v853
  %v858 = vmul.f32 %v754, %v853
  %v859 = vmul.f32 %v755, %v853
  %v860 = vmul.f32 %v756, %v853
  %v861 = vmul.f32 %v757, %v853
  %v862 = vmul.f32 %v758, %v853
  %v863 = vsel %vm103, %v855, 0.0
  %864 = vadd.xlane.f32.xlu0 %v863
  %v865 = vpop.xlane.xlu0 %864
  %v866 = vsel %vm103, %v856, 0.0
  %867 = vadd.xlane.f32.xlu0 %v866
  %v868 = vpop.xlane.xlu0 %867
  %v869 = vsel %vm103, %v857, 0.0
  %870 = vadd.xlane.f32.xlu0 %v869
  %v871 = vpop.xlane.xlu0 %870
  %v872 = vsel %vm103, %v858, 0.0
  %873 = vadd.xlane.f32.xlu0 %v872
  %v874 = vpop.xlane.xlu0 %873
  %v875 = vsel %vm103, %v859, 0.0
  %876 = vadd.xlane.f32.xlu0 %v875
  %v877 = vpop.xlane.xlu0 %876
  %v878 = vsel %vm103, %v860, 0.0
  %879 = vadd.xlane.f32.xlu0 %v878
  %v880 = vpop.xlane.xlu0 %879
  %v881 = vsel %vm103, %v861, 0.0
  %882 = vadd.xlane.f32.xlu0 %v881
  %v883 = vpop.xlane.xlu0 %882
  %v884 = vsel %vm103, %v862, 0.0
  %885 = vadd.xlane.f32.xlu0 %v884
  %v886 = vpop.xlane.xlu0 %885
  %v887 = vld [vmem:[#allocation4] sm:$0x1]
  %v889 = vlaneseq
  %v890 = vshrl.u32 %v889, 7
  %v891 = vsub.s32 0, %v890
  %v892 = vrot.slane %v887, %v891
  %v894 = vadd.f32 %v865, %v892
  %v895 = vadd.f32 %v868, %v892
  %v896 = vadd.f32 %v871, %v892
  %v897 = vadd.f32 %v874, %v892
  %v898 = vadd.f32 %v877, %v892
  %v899 = vadd.f32 %v880, %v892
  %v900 = vadd.f32 %v883, %v892
  %v901 = vadd.f32 %v886, %v892
  %vm902 = vcmask 1024
  %903 = vst.msk [vmem:[%s6] sm:$0x3] %vm902, %v894
  %904 = vst.msk [vmem:[%s6 + $0x2] sm:$0x3] %vm902, %v895
  %905 = vst.msk [vmem:[%s6 + $0x4] sm:$0x3] %vm902, %v896
  %906 = vst.msk [vmem:[%s6 + $0x6] sm:$0x3] %vm902, %v897
  %907 = vst.msk [vmem:[%s6 + $0x8] sm:$0x3] %vm902, %v898
  %908 = vst.msk [vmem:[%s6 + $0xa] sm:$0x3] %vm902, %v899
  %909 = vst.msk [vmem:[%s6 + $0xc] sm:$0x3] %vm902, %v900
  %910 = vst.msk [vmem:[%s6 + $0xe] sm:$0x3] %vm902, %v901
  // Predicated region
  $region26: #{tpu_custom_call.1} parent=0 // pred_check
    _
  $region27: #{tpu_custom_call.1} parent=0 // pred_check_branch
    %912 = sbr.rel (0) target = $region29
  $region28: #{tpu_custom_call.1} parent=0 // pred_region
    _
  $region29: #{tpu_custom_call.1} parent=0 // pred_fallthru
    _
  // Predicated region
  $region30: #{tpu_custom_call.1} parent=0 // pred_check
    _
  $region31: #{tpu_custom_call.1} parent=0 // pred_check_branch
    %914 = sbr.rel (0) target = $region33
  $region32: #{tpu_custom_call.1} parent=0 // pred_region
    _
  $region33: #{tpu_custom_call.1} parent=0 // pred_fallthru
    _

</llo_original>
